<compile_context>
chip_gen: v7x
topology: tpu7x:2x2x1
jax: 0.10.0
libtpu: 0.0.40
codegen_flags: <defaults>
</compile_context>

<pallas_src>
import jax
import jax.numpy as jnp
import numpy as np
from jax import lax
from jax.experimental import pallas as pl
from jax.experimental.pallas import tpu as pltpu


def _softmax_rows(g):
    """Row softmax over the last (lane) axis; f32 math, reciprocal on the EUP."""
    g = jnp.exp(g - jnp.max(g, axis=-1, keepdims=True))
    return g * pl.reciprocal(jnp.sum(g, axis=-1, keepdims=True), approx=False)


def _prep_kernel(ne_ref, bp_ref, s_ref, bias_t_ref):
    """Batch-invariant prep: supports = softmax(relu(E E^T)); bias^T = bp^T E^T."""
    E = ne_ref[...]                                                    # (N, D)
    g = lax.dot_general(E, E, (((1,), (1,)), ((), ())),
                        preferred_element_type=jnp.float32)            # (N, N)
    s_ref[...] = _softmax_rows(jnp.maximum(g, 0.0))
    bias_t_ref[...] = lax.dot_general(bp_ref[...], E, (((0,), (1,)), ((), ())),
                                      preferred_element_type=jnp.float32)  # (Co, N)


def _make_batched_kernel(bt, N, Ci, Co, D, enable_explainability, mm_dtype):
    DCi = D * Ci

    def kernel(s_ref, bias_t_ref, et_ref, w_ref, te_ref, xt_ref, *rest):
        if enable_explainability:
            mask_ref, o_ref = rest
        else:
            (o_ref,) = rest

        s = s_ref[...]                        # (N, N)   node supports (precomputed)
        bias_t = bias_t_ref[...]              # (Co, N)
        e_t = et_ref[...]                     # (D, N)   node embeddings^T
        w0 = w_ref[0].astype(mm_dtype)        # (Co, D*Ci)  k = 0 (identity term)
        w1 = w_ref[1].astype(mm_dtype)        # (Co, D*Ci)  k = 1 (support term)

        for b in range(bt):                   # static unroll over the batch tile
            # time supports: softmax(relu(T^T T), axis=-1)
            t = te_ref[b].astype(mm_dtype)                            # (Dt, N)
            g = lax.dot_general(t, t, (((0,), (0,)), ((), ())),
                                preferred_element_type=jnp.float32)    # (N, N)
            ts = _softmax_rows(jnp.maximum(g, 0.0))

            if enable_explainability:
                a = 0.5 * (s + ts) * mask_ref[b]
            else:
                a = 0.5 * (s + ts)

            x_t = xt_ref[b]                                           # (Ci, N)
            # x_b^T = x^T A^T  (contract over A's second axis)
            xb_t = lax.dot_general(x_t.astype(mm_dtype), a.astype(mm_dtype),
                                   (((1,), (1,)), ((), ())),
                                   preferred_element_type=jnp.float32)  # (Ci, N)

            # Row-wise Khatri-Rao (transposed): kr[d*Ci+i, n] = E[n,d] * x[n,i]
            kr0 = (e_t[:, None, :] * x_t[None, :, :]).reshape(DCi, N)
            kr1 = (e_t[:, None, :] * xb_t[None, :, :]).reshape(DCi, N)

            out_t = (jnp.dot(w0, kr0.astype(mm_dtype),
                             preferred_element_type=jnp.float32)
                     + jnp.dot(w1, kr1.astype(mm_dtype),
                               preferred_element_type=jnp.float32)
                     + bias_t)                                        # (Co, N)
            o_ref[b] = out_t.astype(o_ref.dtype)

    return kernel


def _pick_batch_tile(B, cap=8):
    bt = 1
    for cand in range(1, min(B, cap) + 1):
        if B % cand == 0:
            bt = cand
    return bt


def mask_gate_forward(x, node_embeddings, mask, enable_explainability,
                      time_embeddings, weights_pool, bias_pool,
                      *, batch_tile=None, matmul_dtype=jnp.float32):
    B, N, Ci = x.shape
    D = node_embeddings.shape[1]
    _, K, _, Co = weights_pool.shape
    Dt = time_embeddings.shape[1]
    if K != 2:
        raise ValueError("MaskGate forward stacks exactly 2 graph terms; cheb_k must be 2.")
    enable = bool(enable_explainability)

    # ---- batch-invariant prep (single Pallas invocation) ----
    supports, bias_t = pl.pallas_call(
        _prep_kernel,
        out_shape=(jax.ShapeDtypeStruct((N, N), jnp.float32),
                   jax.ShapeDtypeStruct((Co, N), jnp.float32)),
    )(node_embeddings.astype(jnp.float32), bias_pool.astype(jnp.float32))

    # ---- layout plumbing (plain JAX glue, done once per call) ----
    ne_t = jnp.transpose(node_embeddings).astype(jnp.float32)            # (D, N)
    x_t = jnp.transpose(x, (0, 2, 1)).astype(jnp.float32)                # (B, Ci, N)
    # W[k, o, d*Ci + i] = weights_pool[d, k, i, o]
    w = jnp.transpose(weights_pool, (1, 3, 0, 2)).reshape(K, Co, D * Ci)
    w = w.astype(jnp.float32)
    te = time_embeddings.astype(jnp.float32)

    bt = _pick_batch_tile(B) if batch_tile is None else batch_tile
    assert B % bt == 0, "batch_tile must divide the batch size"

    kernel = _make_batched_kernel(bt, N, Ci, Co, D, enable, matmul_dtype)

    in_specs = [
        pl.BlockSpec((N, N), lambda i: (0, 0)),              # supports (shared)
        pl.BlockSpec((Co, N), lambda i: (0, 0)),             # bias^T   (shared)
        pl.BlockSpec((D, N), lambda i: (0, 0)),              # E^T      (shared)
        pl.BlockSpec((K, Co, D * Ci), lambda i: (0, 0, 0)),  # weights  (shared)
        pl.BlockSpec((bt, Dt, N), lambda i: (i, 0, 0)),      # time_embeddings tile
        pl.BlockSpec((bt, Ci, N), lambda i: (i, 0, 0)),      # x^T tile
    ]
    inputs = [supports, bias_t, ne_t, w, te, x_t]
    if enable:
        # mask only DMA'd when it is actually read
        in_specs.append(pl.BlockSpec((bt, N, N), lambda i: (i, 0, 0)))
        inputs.append(mask.astype(jnp.float32))

    out_t = pl.pallas_call(
        kernel,
        out_shape=jax.ShapeDtypeStruct((B, Co, N), jnp.float32),
        grid_spec=pltpu.PrefetchScalarGridSpec(
            num_scalar_prefetch=0,
            grid=(B // bt,),
            in_specs=in_specs,
            out_specs=pl.BlockSpec((bt, Co, N), lambda i: (i, 0, 0)),
        ),
        compiler_params=pltpu.CompilerParams(dimension_semantics=("parallel",)),
    )(*inputs)

    # lane-dense (B, Co, N) slab back to the module's (B, N, Co) layout
    return jnp.transpose(out_t, (0, 2, 1))


def mask_gate_reference(x, ne, mask, enable, te, wp, bp):
    """Pure-JAX reference mirroring the PyTorch forward."""
    s = jax.nn.softmax(jax.nn.relu(ne @ ne.T), axis=1)
    ts = jax.nn.softmax(jax.nn.relu(jnp.einsum('bei,bej->bij', te, te)), axis=2)
    if enable:
        s = s * mask
        ts = ts * mask
    A = (s + ts) / 2.0
    weights = jnp.einsum('nd,dkio->nkio', ne, wp)
    bias = ne @ bp
    x_a = jnp.broadcast_to(x, (A.shape[0],) + x.shape[1:])   # identity @ x
    x_b = jnp.einsum('bnm,bmi->bni', A, x)
    x_g = jnp.stack([x_a, x_b], axis=1).transpose(0, 2, 1, 3)  # (B, N, 2, Ci)
    return jnp.einsum('bnki,nkio->bno', x_g, weights) + bias


if __name__ == "__main__":
    B, N, Ci, Co, K, D = 2, 16, 8, 8, 2, 16   # batch, nodes, dim_in, dim_out, cheb_k, embed_dim

    key = jax.random.PRNGKey(0)
    k1, k2, k3, k4, k5, k6 = jax.random.split(key, 6)
    x = jax.random.normal(k1, (B, N, Ci), jnp.float32)
    node_embeddings = jax.random.normal(k2, (N, D), jnp.float32)
    time_embeddings = jax.random.normal(k3, (B, D, N), jnp.float32)
    mask = (jax.random.uniform(k4, (B, N, N)) > 0.3).astype(jnp.float32)
    weights_pool = 0.1 * jax.random.normal(k5, (D, K, Ci, Co), jnp.float32)
    bias_pool = 0.1 * jax.random.normal(k6, (D, Co), jnp.float32)

    for enable_explainability in (True, False):
        out = mask_gate_forward(x, node_embeddings, mask, enable_explainability,
                                time_embeddings, weights_pool, bias_pool)
        out = jax.block_until_ready(out)
        ref = mask_gate_reference(x, node_embeddings, mask, enable_explainability,
                                  time_embeddings, weights_pool, bias_pool)
        np.testing.assert_allclose(np.asarray(out), np.asarray(ref),
                                   rtol=1e-4, atol=1e-4)

    print("KERNEL_OK")
</pallas_src>

<mosaic_0001>
module attributes {stable_mosaic.version = 11 : i64} {
  func.func @_prep_kernel(%arg0: memref<16x16xf32, #tpu.memory_space<vmem>>, %arg1: memref<16x8xf32, #tpu.memory_space<vmem>>, %arg2: memref<16x16xf32, #tpu.memory_space<vmem>>, %arg3: memref<8x16xf32, #tpu.memory_space<vmem>>) attributes {dimension_semantics = [], scalar_prefetch = 0 : i64, scratch_operands = 0 : i64, tpu.core_type = #tpu.core_type<tc>} {
    %c0 = arith.constant 0 : index
    %c0_0 = arith.constant 0 : index
    %0 = vector.load %arg0[%c0, %c0_0] : memref<16x16xf32, #tpu.memory_space<vmem>>, vector<16x16xf32>
    %cst = arith.constant dense<0.000000e+00> : vector<16x16xf32>
    %1 = tpu.matmul %0, %0, %cst {dimension_numbers = #tpu.dot_dimension_numbers<[1], [1], [0], [0], [0, 0, 1, 0], [], []>} : vector<16x16xf32>, vector<16x16xf32>, vector<16x16xf32> -> vector<16x16xf32>
    %cst_1 = arith.constant 0.000000e+00 : f32
    %2 = vector.broadcast %cst_1 : f32 to vector<16x16xf32>
    %3 = arith.maximumf %1, %2 : vector<16x16xf32>
    %cst_2 = arith.constant dense<0xFF800000> : vector<16xf32>
    %4 = vector.multi_reduction <maximumf>, %3, %cst_2 [1] : vector<16x16xf32> to vector<16xf32>
    %5 = vector.shape_cast %4 : vector<16xf32> to vector<16x1xf32>
    %6 = vector.broadcast %5 : vector<16x1xf32> to vector<16x16xf32>
    %7 = arith.subf %3, %6 : vector<16x16xf32>
    %8 = math.exp %7 : vector<16x16xf32>
    %cst_3 = arith.constant dense<0.000000e+00> : vector<16xf32>
    %9 = vector.multi_reduction <add>, %8, %cst_3 [1] : vector<16x16xf32> to vector<16xf32>
    %10 = vector.shape_cast %9 : vector<16xf32> to vector<16x1xf32>
    %11 = tpu.reciprocal %10 : vector<16x1xf32> -> vector<16x1xf32>
    %12 = vector.broadcast %11 : vector<16x1xf32> to vector<16x16xf32>
    %13 = arith.mulf %8, %12 : vector<16x16xf32>
    %c0_4 = arith.constant 0 : index
    %c0_5 = arith.constant 0 : index
    %14 = vector.load %arg2[%c0_4, %c0_5] : memref<16x16xf32, #tpu.memory_space<vmem>>, vector<16x16xf32>
    tpu.vector_store %arg2[%c0_4, %c0_5], %13 {strides = array<i32>} : memref<16x16xf32, #tpu.memory_space<vmem>>, vector<16x16xf32>,
    %c0_6 = arith.constant 0 : index
    %c0_7 = arith.constant 0 : index
    %15 = vector.load %arg1[%c0_6, %c0_7] : memref<16x8xf32, #tpu.memory_space<vmem>>, vector<16x8xf32>
    %cst_8 = arith.constant dense<0.000000e+00> : vector<8x16xf32>
    %16 = tpu.matmul %15, %0, %cst_8 {dimension_numbers = #tpu.dot_dimension_numbers<[0], [1], [1], [0], [0, 1, 1, 0], [], []>} : vector<16x8xf32>, vector<16x16xf32>, vector<8x16xf32> -> vector<8x16xf32>
    %c0_9 = arith.constant 0 : index
    %c0_10 = arith.constant 0 : index
    %17 = vector.load %arg3[%c0_9, %c0_10] : memref<8x16xf32, #tpu.memory_space<vmem>>, vector<8x16xf32>
    tpu.vector_store %arg3[%c0_9, %c0_10], %16 {strides = array<i32>} : memref<8x16xf32, #tpu.memory_space<vmem>>, vector<8x16xf32>,
    return
  }
}

</mosaic_0001>

<llo_original>
// kernel: tpu_custom_call.1
$region0: #{tpu_custom_call.1}
  #allocation0 [shape = 'u32[]', space=smem, size = 0x4, offset = 0x4, fixed_abs, tag = 'smem constant byte address 0x4 - core index']
  #allocation1 [shape = 'u32[144,128]{1,0:T(1,128)}', space=vmem, size = 0x12000, scoped, tag = 'internal scratch']
  %s0 = inlined_call_operand.vmem [shape: f32[16,16], index: 0, kind: input, shape index: {}]
  %s1 = inlined_call_operand.vmem [shape: f32[16,8], index: 1, kind: input, shape index: {}]
  %s2 = inlined_call_operand.hbm [shape: f32[16,16], index: 2, kind: output, shape index: {0}]
  %s3 = inlined_call_operand.hbm [shape: f32[8,16], index: 3, kind: output, shape index: {1}]
  %4 = xla_tuple %s2, %s3
  %s5 = sld [smem:[#allocation0]]
  $region26: #{tpu_custom_call.1} parent=0
    _
  %s7 = ssub.s32 1, %s5
  %s8 = scalar_select 0, %s7, %s5
  $region1: #{tpu_custom_call.1} parent=0
    #allocation2 [shape = 'u8[8192]{0}', space=vmem, size = 0x2000, scoped, tag = 'output window, operand 0, single buffered']
    #allocation3 [shape = 's32[1]{0}', space=sflag, size = 0x4, scoped, tag = 'scoped memory for tpu_custom_call.1']
    #allocation4 [shape = 'u8[4096]{0}', space=vmem, size = 0x1000, scoped, tag = 'output window, operand 1, single buffered']
    #allocation5 [shape = 's32[1]{0}', space=sflag, size = 0x4, scoped, tag = 'scoped memory for tpu_custom_call.1']
    %9 = vsyncpa [#allocation3], 0
    %10 = vsyncpa [#allocation5], 0
    // Predicated region
    $region2: #{tpu_custom_call.1} parent=1 // pred_check
      _
    $region3: #{tpu_custom_call.1} parent=1 // pred_check_branch
      %12 = sbr.rel (0) target = $region5
    $region4: #{tpu_custom_call.1} parent=1 // pred_region
      _
    $region5: #{tpu_custom_call.1} parent=1 // pred_fallthru
      _
    // Predicated region
    $region6: #{tpu_custom_call.1} parent=1 // pred_check
      _
    $region7: #{tpu_custom_call.1} parent=1 // pred_check_branch
      %14 = sbr.rel (0) target = $region9
    $region8: #{tpu_custom_call.1} parent=1 // pred_region
      _
    $region9: #{tpu_custom_call.1} parent=1 // pred_fallthru
      _
    %v15 = vld [vmem:[%s0] sm:$0xff]
    %v16 = vld [vmem:[%s0 + $0x8] sm:$0xff]
    %vm17 = vcmask 130048
    %v19 = vsel %vm17, %v15, 0
    %v22 = vsel %vm17, %v16, 0
    %24 = vmatprep.subr.mxu0 0.0
    %25 = vmatpush1.xpose.msra.mxu0 %v19
    %26 = vmatprep.subr.mxu0 0.0
    %27 = vmatpush1.xpose.msra.mxu0 %v22
    %28 = vmatprep.subr.mxu0 0.0
    %29 = vmatpush1.xpose.msra.mxu0 0.0
    %30 = vmatprep.subr.mxu0 0.0
    %31 = vmatpush1.xpose.msra.mxu0 0.0
    %32 = vmatprep.subr.mxu0 0.0
    %33 = vmatpush1.xpose.msra.mxu0 0.0
    %34 = vmatprep.subr.mxu0 0.0
    %35 = vmatpush1.xpose.msra.mxu0 0.0
    %36 = vmatprep.subr.mxu0 0.0
    %37 = vmatpush1.xpose.msra.mxu0 0.0
    %38 = vmatprep.subr.mxu0 0.0
    %39 = vmatpush1.xpose.msra.mxu0 0.0
    %40 = vmatprep.subr.mxu0 0.0
    %41 = vmatpush1.xpose.msra.mxu0 0.0
    %42 = vmatprep.subr.mxu0 0.0
    %43 = vmatpush1.xpose.msra.mxu0 0.0
    %44 = vmatprep.subr.mxu0 0.0
    %45 = vmatpush1.xpose.msra.mxu0 0.0
    %46 = vmatprep.subr.mxu0 0.0
    %47 = vmatpush1.xpose.msra.mxu0 0.0
    %48 = vmatprep.subr.mxu0 0.0
    %49 = vmatpush1.xpose.msra.mxu0 0.0
    %50 = vmatprep.subr.mxu0 0.0
    %51 = vmatpush1.xpose.msra.mxu0 0.0
    %52 = vmatprep.subr.mxu0 0.0
    %53 = vmatpush1.xpose.msra.mxu0 0.0
    %54 = vmatprep.subr.mxu0 0.0
    %55 = vmatpush1.xpose.msra.mxu0 0.0
    %56 = vmatprep.subr.mxu0 0.0
    %57 = vmatpush1.xpose.msra.mxu0 0.0
    %58 = vmatprep.subr.mxu0 0.0
    %59 = vmatpush1.xpose.msra.mxu0 0.0
    %60 = vmatprep.subr.mxu0 0.0
    %61 = vmatpush1.xpose.msra.mxu0 0.0
    %62 = vmatprep.subr.mxu0 0.0
    %63 = vmatpush1.xpose.msra.mxu0 0.0
    %64 = vmatprep.subr.mxu0 0.0
    %65 = vmatpush1.xpose.msra.mxu0 0.0
    %66 = vmatprep.subr.mxu0 0.0
    %67 = vmatpush1.xpose.msra.mxu0 0.0
    %68 = vmatprep.subr.mxu0 0.0
    %69 = vmatpush1.xpose.msra.mxu0 0.0
    %70 = vmatprep.subr.mxu0 0.0
    %71 = vmatpush1.xpose.msra.mxu0 0.0
    %72 = vmatprep.subr.mxu0 0.0
    %73 = vmatpush1.xpose.msra.mxu0 0.0
    %74 = vmatprep.subr.mxu0 0.0
    %75 = vmatpush1.xpose.msra.mxu0 0.0
    %76 = vmatprep.subr.mxu0 0.0
    %77 = vmatpush1.xpose.msra.mxu0 0.0
    %78 = vmatprep.subr.mxu0 0.0
    %79 = vmatpush1.xpose.msra.mxu0 0.0
    %80 = vmatprep.subr.mxu0 0.0
    %81 = vmatpush1.xpose.msra.mxu0 0.0
    %82 = vmatprep.subr.mxu0 0.0
    %83 = vmatpush1.xpose.msra.mxu0 0.0
    %84 = vmatprep.subr.mxu0 0.0
    %85 = vmatpush1.xpose.msra.mxu0 0.0
    %86 = vmatprep.subr.mxu0 0.0
    %87 = vmatpush1.xpose.msra.mxu0 0.0
    %88 = vmatprep.mubr.f32.mxu0 0.0
    %89 = vmatmul.mubr.f32.gmra.mrb[0].mxu0 %v19
    %v90 = vpop.f32.mrb[0].mxu0
    %v91 = vadd.f32 0.0, %v90
    %v92 = vpop.f32.mrb[0].mxu0
    %93 = vmatprep.mubr.f32.mxu0 0.0
    %94 = vmatmul.mubr.f32.gmra.mrb[0].mxu0 %v22
    %v95 = vpop.f32.mrb[0].mxu0
    %v96 = vadd.f32 0.0, %v95
    %v97 = vpop.f32.mrb[0].mxu0
    %98 = vdwg.mxu0
    %v99 = vmax.f32 %v91, 0.0
    %v100 = vmax.f32 %v96, 0.0
    %v101 = vsel %vm17, %v99, -inf
    %102 = vmax.xlane.f32.xlu0 %v101
    %v103 = vpop.xlane.xlu0 %102
    %v104 = vsel %vm17, %v100, -inf
    %105 = vmax.xlane.f32.xlu0 %v104
    %v106 = vpop.xlane.xlu0 %105
    %v107 = vsub.f32 %v99, %v103
    %v108 = vsub.f32 %v100, %v106
    %v109 = vmul.f32 %v107, 1.442695
    %v110 = vpow.pop %v109
    %v111 = vmul.f32 %v108, 1.442695
    %v112 = vpow.pop %v111
    %v113 = vsel %vm17, %v110, 0.0
    %114 = vadd.xlane.f32.xlu0 %v113
    %v115 = vpop.xlane.xlu0 %114
    %v116 = vsel %vm17, %v112, 0.0
    %117 = vadd.xlane.f32.xlu0 %v116
    %v118 = vpop.xlane.xlu0 %117
    %v119 = vrcp.pop %v115
    %v120 = vrcp.pop %v118
    %v121 = vmul.f32 %v110, %v119
    %v122 = vmul.f32 %v112, %v120
    %123 = vst.msk [vmem:[#allocation2] sm:$0xff] %vm17, %v121
    %124 = vst.msk [vmem:[#allocation2 + $0x8] sm:$0xff] %vm17, %v122
    %v125 = vld [vmem:[%s1] sm:$0xff]
    %v126 = vld [vmem:[%s1 + $0x8] sm:$0xff]
    %127 = vxpose.xlu0.b32.start [1/16] %v125, 128
    %128 = vxpose.xlu0.b32.cont [2/16] %v126, 128
    %129 = vxpose.xlu0.b32.cont [3/16] 0.0, 128
    %130 = vxpose.xlu0.b32.cont [4/16] 0.0, 128
    %131 = vxpose.xlu0.b32.cont [5/16] 0.0, 128
    %132 = vxpose.xlu0.b32.cont [6/16] 0.0, 128
    %133 = vxpose.xlu0.b32.cont [7/16] 0.0, 128
    %134 = vxpose.xlu0.b32.cont [8/16] 0.0, 128
    %135 = vxpose.xlu0.b32.cont [9/16] 0.0, 128
    %136 = vxpose.xlu0.b32.cont [10/16] 0.0, 128
    %137 = vxpose.xlu0.b32.cont [11/16] 0.0, 128
    %138 = vxpose.xlu0.b32.cont [12/16] 0.0, 128
    %139 = vxpose.xlu0.b32.cont [13/16] 0.0, 128
    %140 = vxpose.xlu0.b32.cont [14/16] 0.0, 128
    %141 = vxpose.xlu0.b32.cont [15/16] 0.0, 128
    %142 = vxpose.xlu0.b32.end [16/16] 0.0, 128
    %v143 = vpop.trf.xlu0
    %v144 = vpop.trf.xlu0
    %v145 = vpop.trf.xlu0
    %v146 = vpop.trf.xlu0
    %v147 = vpop.trf.xlu0
    %v148 = vpop.trf.xlu0
    %v149 = vpop.trf.xlu0
    %v150 = vpop.trf.xlu0
    %v151 = vpop.trf.xlu0
    %v152 = vpop.trf.xlu0
    %v153 = vpop.trf.xlu0
    %v154 = vpop.trf.xlu0
    %v155 = vpop.trf.xlu0
    %v156 = vpop.trf.xlu0
    %v157 = vpop.trf.xlu0
    %v158 = vpop.trf.xlu0
    %v160 = vsel %vm17, %v143, 0
    %162 = vmatprep.subr.mxu0 0.0
    %163 = vmatpush1.xpose.msra.mxu0 %v19
    %164 = vmatprep.subr.mxu0 0.0
    %165 = vmatpush1.xpose.msra.mxu0 %v22
    %166 = vmatprep.subr.mxu0 0.0
    %167 = vmatpush1.xpose.msra.mxu0 0.0
    %168 = vmatprep.subr.mxu0 0.0
    %169 = vmatpush1.xpose.msra.mxu0 0.0
    %170 = vmatprep.subr.mxu0 0.0
    %171 = vmatpush1.xpose.msra.mxu0 0.0
    %172 = vmatprep.subr.mxu0 0.0
    %173 = vmatpush1.xpose.msra.mxu0 0.0
    %174 = vmatprep.subr.mxu0 0.0
    %175 = vmatpush1.xpose.msra.mxu0 0.0
    %176 = vmatprep.subr.mxu0 0.0
    %177 = vmatpush1.xpose.msra.mxu0 0.0
    %178 = vmatprep.subr.mxu0 0.0
    %179 = vmatpush1.xpose.msra.mxu0 0.0
    %180 = vmatprep.subr.mxu0 0.0
    %181 = vmatpush1.xpose.msra.mxu0 0.0
    %182 = vmatprep.subr.mxu0 0.0
    %183 = vmatpush1.xpose.msra.mxu0 0.0
    %184 = vmatprep.subr.mxu0 0.0
    %185 = vmatpush1.xpose.msra.mxu0 0.0
    %186 = vmatprep.subr.mxu0 0.0
    %187 = vmatpush1.xpose.msra.mxu0 0.0
    %188 = vmatprep.subr.mxu0 0.0
    %189 = vmatpush1.xpose.msra.mxu0 0.0
    %190 = vmatprep.subr.mxu0 0.0
    %191 = vmatpush1.xpose.msra.mxu0 0.0
    %192 = vmatprep.subr.mxu0 0.0
    %193 = vmatpush1.xpose.msra.mxu0 0.0
    %194 = vmatprep.subr.mxu0 0.0
    %195 = vmatpush1.xpose.msra.mxu0 0.0
    %196 = vmatprep.subr.mxu0 0.0
    %197 = vmatpush1.xpose.msra.mxu0 0.0
    %198 = vmatprep.subr.mxu0 0.0
    %199 = vmatpush1.xpose.msra.mxu0 0.0
    %200 = vmatprep.subr.mxu0 0.0
    %201 = vmatpush1.xpose.msra.mxu0 0.0
    %202 = vmatprep.subr.mxu0 0.0
    %203 = vmatpush1.xpose.msra.mxu0 0.0
    %204 = vmatprep.subr.mxu0 0.0
    %205 = vmatpush1.xpose.msra.mxu0 0.0
    %206 = vmatprep.subr.mxu0 0.0
    %207 = vmatpush1.xpose.msra.mxu0 0.0
    %208 = vmatprep.subr.mxu0 0.0
    %209 = vmatpush1.xpose.msra.mxu0 0.0
    %210 = vmatprep.subr.mxu0 0.0
    %211 = vmatpush1.xpose.msra.mxu0 0.0
    %212 = vmatprep.subr.mxu0 0.0
    %213 = vmatpush1.xpose.msra.mxu0 0.0
    %214 = vmatprep.subr.mxu0 0.0
    %215 = vmatpush1.xpose.msra.mxu0 0.0
    %216 = vmatprep.subr.mxu0 0.0
    %217 = vmatpush1.xpose.msra.mxu0 0.0
    %218 = vmatprep.subr.mxu0 0.0
    %219 = vmatpush1.xpose.msra.mxu0 0.0
    %220 = vmatprep.subr.mxu0 0.0
    %221 = vmatpush1.xpose.msra.mxu0 0.0
    %222 = vmatprep.subr.mxu0 0.0
    %223 = vmatpush1.xpose.msra.mxu0 0.0
    %224 = vmatprep.subr.mxu0 0.0
    %225 = vmatpush1.xpose.msra.mxu0 0.0
    %226 = vmatprep.mubr.f32.mxu0 0.0
    %227 = vmatmul.mubr.f32.gmra.mrb[0].mxu0 %v160
    %v228 = vpop.f32.mrb[0].mxu0
    %v229 = vadd.f32 0.0, %v228
    %v230 = vpop.f32.mrb[0].mxu0
    %231 = vdwg.mxu0
    %232 = vst.msk [vmem:[#allocation4] sm:$0xff] %vm17, %v229
    // Predicated region
    $region10: #{tpu_custom_call.1} parent=1 // pred_check
      _
    $region11: #{tpu_custom_call.1} parent=1 // pred_check_branch
      %234 = sbr.rel (0) target = $region13
    $region12: #{tpu_custom_call.1} parent=1 // pred_region
      %s236 = ssub.s32 256, 256
      %237 = vsyncadd [#allocation3], %s236
      %s238 = sshll.u32 [#allocation2], 4
      %s239 = int_to_ptr.vmem [resolvable:$true] %s238
      %244 = dma.vmem_to_hbm [thread:$0]  %s239, 256, %s2, [#allocation3], 128, 128, 8
    $region13: #{tpu_custom_call.1} parent=1 // pred_fallthru
      _
    // Predicated region
    $region14: #{tpu_custom_call.1} parent=1 // pred_check
      _
    $region15: #{tpu_custom_call.1} parent=1 // pred_check_branch
      %246 = sbr.rel (0) target = $region17
    $region16: #{tpu_custom_call.1} parent=1 // pred_region
      %s248 = ssub.s32 128, 128
      %249 = vsyncadd [#allocation5], %s248
      %s251 = sshll.u32 [#allocation4], 4
      %s252 = int_to_ptr.vmem [resolvable:$true] %s251
      %254 = dma.vmem_to_hbm [thread:$0]  %s252, 128, %s3, [#allocation5]
    $region17: #{tpu_custom_call.1} parent=1 // pred_fallthru
      _
    // Predicated region
    $region18: #{tpu_custom_call.1} parent=1 // pred_check
      _
    $region19: #{tpu_custom_call.1} parent=1 // pred_check_branch
      %256 = sbr.rel (0) target = $region21
    $region20: #{tpu_custom_call.1} parent=1 // pred_region
      %257 = dma.done [#allocation3], 256
    $region21: #{tpu_custom_call.1} parent=1 // pred_fallthru
      _
    // Predicated region
    $region22: #{tpu_custom_call.1} parent=1 // pred_check
      _
    $region23: #{tpu_custom_call.1} parent=1 // pred_check_branch
      %259 = sbr.rel (0) target = $region25
    $region24: #{tpu_custom_call.1} parent=1 // pred_region
      %260 = dma.done [#allocation5], 128
    $region25: #{tpu_custom_call.1} parent=1 // pred_fallthru
      _
    %261 = vsyncpa [#allocation3], 1
    %262 = vsyncpa [#allocation5], 1

</llo_original>
